<compile_context>
chip_gen: v7x
topology: tpu7x:2x2x1
jax: 0.10.0
libtpu: 0.0.40
codegen_flags: <defaults>
</compile_context>

<pallas_src>
import jax
import jax.numpy as jnp
from jax.experimental import pallas as pl
from jax.experimental.pallas import tpu as pltpu

_SUBLANE = 8
_LANE = 128


def _round_up(x, m):
    return (x + m - 1) // m * m


# ---------------------------------------------------------------------------
# Kernels
# ---------------------------------------------------------------------------
def _linear_kernel(x_ref, w_ref, b_ref, o_ref):
    """o[i, j] (f32, revisited across k) = bias[j] + sum_k x[i, k] @ w[k, j]."""
    k = pl.program_id(2)

    @pl.when(k == 0)
    def _():
        o_ref[...] = jnp.broadcast_to(b_ref[...], o_ref.shape)

    o_ref[...] += jnp.dot(x_ref[...], w_ref[...],
                          preferred_element_type=jnp.float32)


def _linear_dropout_kernel(x_ref, w_ref, b_ref, m_ref, o_ref):
    """Same as _linear_kernel, with the dropout scale (0 or 1/(1-p)) fused into the
    last k step.  program_id/num_programs are read only at the top level."""
    k = pl.program_id(2)
    k_last = pl.num_programs(2) - 1

    @pl.when(k == 0)
    def _():
        o_ref[...] = jnp.broadcast_to(b_ref[...], o_ref.shape)

    o_ref[...] += jnp.dot(x_ref[...], w_ref[...],
                          preferred_element_type=jnp.float32)

    @pl.when(k == k_last)
    def _():
        o_ref[...] = o_ref[...] * m_ref[...]


# ---------------------------------------------------------------------------
# Wrappers
# ---------------------------------------------------------------------------
def prepare_linear_params(w, b, *, tn=512, tk=512, operand_dtype=jnp.bfloat16):
    """One-time weight layout: pad (K, N) up to tile multiples and cast to the MXU
    operand dtype.  Do this once at init so the hot path never pads W."""
    K, N = w.shape
    tn = _round_up(min(tn, _round_up(N, _LANE)), _LANE)
    tk = _round_up(min(tk, _round_up(K, _LANE)), _LANE)
    Kp, Np = _round_up(K, tk), _round_up(N, tn)

    wp = w
    if (Kp, Np) != (K, N):
        wp = jnp.pad(w, ((0, Kp - K), (0, Np - N)))
    wp = wp.astype(operand_dtype)
    bp = jnp.pad(b, (0, Np - N)).astype(jnp.float32).reshape(1, Np)
    return {"w": wp, "b": bp, "K": K, "N": N, "tn": tn, "tk": tk}


def linear_nn_forward(x, params, *, dropout_p=0.0, training=True, rng_key=None, tm=512):
    """Forward of LinearNN: dropout(fc1(x)).

    x: (..., K) float array.  params: output of prepare_linear_params.
    Returns (..., N) float32 (accumulation is always f32).
    """
    wp, bp = params["w"], params["b"]
    K, N = params["K"], params["N"]
    tn, tk = params["tn"], params["tk"]
    Kp, Np = wp.shape

    lead = x.shape[:-1]
    assert x.shape[-1] == K, (x.shape, K)
    x2 = x.reshape(-1, K)
    M = x2.shape[0]

    tm = _round_up(min(tm, _round_up(M, _SUBLANE)), _SUBLANE)
    Mp = _round_up(M, tm)

    xp = x2
    if (Mp, Kp) != (M, K):
        xp = jnp.pad(x2, ((0, Mp - M), (0, Kp - K)))
    xp = xp.astype(wp.dtype)

    grid = (Mp // tm, Np // tn, Kp // tk)
    in_specs = [
        pl.BlockSpec((tm, tk), lambda i, j, k: (i, k)),   # x tile
        pl.BlockSpec((tk, tn), lambda i, j, k: (k, j)),   # W tile
        pl.BlockSpec((1, tn), lambda i, j, k: (0, j)),    # bias (k-invariant -> 1 fetch)
    ]
    out_spec = pl.BlockSpec((tm, tn), lambda i, j, k: (i, j))
    out_shape = jax.ShapeDtypeStruct((Mp, Np), jnp.float32)
    compiler_params = pltpu.CompilerParams(
        dimension_semantics=("parallel", "parallel", "arbitrary"))

    p = float(dropout_p)
    use_dropout = training and p > 0.0

    if use_dropout and p >= 1.0:
        out2 = jnp.zeros((M, N), jnp.float32)
    elif use_dropout:
        if rng_key is None:
            rng_key = jax.random.PRNGKey(0)
        keep = jax.random.bernoulli(rng_key, 1.0 - p, (Mp, Np))
        scale = keep.astype(jnp.float32) * (1.0 / (1.0 - p))
        in_specs_d = in_specs + [
            pl.BlockSpec((tm, tn), lambda i, j, k: (i, j)),  # dropout scale (k-invariant)
        ]
        out = pl.pallas_call(
            _linear_dropout_kernel,
            out_shape=out_shape,
            grid=grid,
            in_specs=in_specs_d,
            out_specs=out_spec,
            compiler_params=compiler_params,
        )(xp, wp, bp, scale)
        out2 = out if (Mp, Np) == (M, N) else out[:M, :N]
    else:
        out = pl.pallas_call(
            _linear_kernel,
            out_shape=out_shape,
            grid=grid,
            in_specs=in_specs,
            out_specs=out_spec,
            compiler_params=compiler_params,
        )(xp, wp, bp)
        out2 = out if (Mp, Np) == (M, N) else out[:M, :N]

    return out2.reshape(*lead, N)


def init_linear_params(key, input_size, output_size):
    """Deterministic init matching nn.Linear's shapes (uniform +/- 1/sqrt(fan_in)).
    PyTorch stores weight as (out, in); we keep it transposed as (in, out)."""
    kw, kb = jax.random.split(key)
    bound = 1.0 / jnp.sqrt(jnp.float32(input_size))
    w = jax.random.uniform(kw, (input_size, output_size), jnp.float32, -bound, bound)
    b = jax.random.uniform(kb, (output_size,), jnp.float32, -bound, bound)
    return w, b


if __name__ == "__main__":
    key = jax.random.PRNGKey(0)
    k_x, k_p, k_drop = jax.random.split(key, 3)

    batch = 8
    input_size = 32
    output_size = 16

    x = jax.random.normal(k_x, (batch, input_size), dtype=jnp.float32)
    w, b = init_linear_params(k_p, input_size, output_size)
    ref = x @ w + b[None, :]

    # Exact-precision path (f32 operands) — LinearNN(input_size, output_size, dropout=0).
    params_f32 = prepare_linear_params(w, b, operand_dtype=jnp.float32)
    out = linear_nn_forward(x, params_f32, dropout_p=0.0)
    out = jax.block_until_ready(out)
    assert out.shape == (batch, output_size)
    assert jnp.allclose(out, ref, atol=1e-5, rtol=1e-5)

    # Default fast path: bf16 operands, f32 accumulation (per perf review).
    params_bf16 = prepare_linear_params(w, b)  # operand_dtype=bf16
    out_bf16 = linear_nn_forward(x, params_bf16, dropout_p=0.0)
    out_bf16 = jax.block_until_ready(out_bf16)
    assert out_bf16.shape == (batch, output_size)
    assert jnp.allclose(out_bf16, ref, atol=3e-2, rtol=3e-2)

    # Dropout path (training): every element is either 0 or ref / (1 - p).
    p = 0.5
    out_drop = linear_nn_forward(x, params_f32, dropout_p=p, training=True, rng_key=k_drop)
    out_drop = jax.block_until_ready(out_drop)
    assert out_drop.shape == (batch, output_size)
    ok = jnp.all((out_drop == 0.0)
                 | jnp.isclose(out_drop, ref / (1.0 - p), atol=1e-4, rtol=1e-4))
    assert bool(ok)

    print("KERNEL_OK")
</pallas_src>

<mosaic_0001>
module attributes {stable_mosaic.version = 11 : i64} {
  func.func @_linear_kernel(%arg0: i32, %arg1: i32, %arg2: i32, %arg3: memref<8x128xf32, #tpu.memory_space<vmem>>, %arg4: memref<128x128xf32, #tpu.memory_space<vmem>>, %arg5: memref<1x128xf32, #tpu.memory_space<vmem>>, %arg6: memref<8x128xf32, #tpu.memory_space<vmem>>) attributes {dimension_semantics = [#tpu.dimension_semantics<parallel>, #tpu.dimension_semantics<parallel>, #tpu.dimension_semantics<arbitrary>], iteration_bounds = array<i64: 1, 1, 1>, scalar_prefetch = 0 : i64, scratch_operands = 0 : i64, tpu.core_type = #tpu.core_type<tc>, window_params = [{transform_indices = @transform_0, window_bounds = array<i64: 8, 128>}, {transform_indices = @transform_1, window_bounds = array<i64: 128, 128>}, {transform_indices = @transform_2, window_bounds = array<i64: 1, 128>}, {transform_indices = @transform_3, window_bounds = array<i64: 8, 128>}]} {
    %c0_i32 = arith.constant 0 : i32
    %0 = arith.cmpi eq, %arg2, %c0_i32 : i32
    %1 = arith.extui %0 : i1 to i32
    %c0_i32_0 = arith.constant 0 : i32
    %2 = arith.cmpi ne, %1, %c0_i32_0 : i32
    scf.if %2 {
      %c0_8 = arith.constant 0 : index
      %c0_9 = arith.constant 0 : index
      %9 = vector.load %arg5[%c0_8, %c0_9] : memref<1x128xf32, #tpu.memory_space<vmem>>, vector<1x128xf32>
      %10 = vector.shape_cast %9 : vector<1x128xf32> to vector<1x128xf32>
      %11 = vector.broadcast %10 : vector<1x128xf32> to vector<8x128xf32>
      %c0_10 = arith.constant 0 : index
      %c0_11 = arith.constant 0 : index
      %12 = vector.load %arg6[%c0_10, %c0_11] : memref<8x128xf32, #tpu.memory_space<vmem>>, vector<8x128xf32>
      tpu.vector_store %arg6[%c0_10, %c0_11], %11 {strides = array<i32>} : memref<8x128xf32, #tpu.memory_space<vmem>>, vector<8x128xf32>,
    } else {
    }
    %c0 = arith.constant 0 : index
    %c0_1 = arith.constant 0 : index
    %3 = vector.load %arg6[%c0, %c0_1] : memref<8x128xf32, #tpu.memory_space<vmem>>, vector<8x128xf32>
    %c0_2 = arith.constant 0 : index
    %c0_3 = arith.constant 0 : index
    %4 = vector.load %arg3[%c0_2, %c0_3] : memref<8x128xf32, #tpu.memory_space<vmem>>, vector<8x128xf32>
    %c0_4 = arith.constant 0 : index
    %c0_5 = arith.constant 0 : index
    %5 = vector.load %arg4[%c0_4, %c0_5] : memref<128x128xf32, #tpu.memory_space<vmem>>, vector<128x128xf32>
    %cst = arith.constant dense<0.000000e+00> : vector<8x128xf32>
    %6 = tpu.matmul %4, %5, %cst {dimension_numbers = #tpu.dot_dimension_numbers<[1], [0], [0], [1], [0, 0, 1, 1], [], []>} : vector<8x128xf32>, vector<128x128xf32>, vector<8x128xf32> -> vector<8x128xf32>
    %7 = arith.addf %3, %6 : vector<8x128xf32>
    %c0_6 = arith.constant 0 : index
    %c0_7 = arith.constant 0 : index
    %8 = vector.load %arg6[%c0_6, %c0_7] : memref<8x128xf32, #tpu.memory_space<vmem>>, vector<8x128xf32>
    tpu.vector_store %arg6[%c0_6, %c0_7], %7 {strides = array<i32>} : memref<8x128xf32, #tpu.memory_space<vmem>>, vector<8x128xf32>,
    return
  }
  func.func @transform_0(%arg0: i32, %arg1: i32, %arg2: i32) -> (i32, i32) {
    %c0_i32 = arith.constant 0 : i32
    return %arg0, %arg2 : i32, i32
  }
  func.func @transform_1(%arg0: i32, %arg1: i32, %arg2: i32) -> (i32, i32) {
    %c0_i32 = arith.constant 0 : i32
    return %arg2, %arg1 : i32, i32
  }
  func.func @transform_2(%arg0: i32, %arg1: i32, %arg2: i32) -> (i32, i32) {
    %c0_i32 = arith.constant 0 : i32
    %c0_i32_0 = arith.constant 0 : i32
    return %c0_i32, %arg1 : i32, i32
  }
  func.func @transform_3(%arg0: i32, %arg1: i32, %arg2: i32) -> (i32, i32) {
    %c0_i32 = arith.constant 0 : i32
    return %arg0, %arg1 : i32, i32
  }
}

</mosaic_0001>

<llo_original>
// kernel: tpu_custom_call.1
$region0: #{tpu_custom_call.1}
  #allocation0 [shape = 'u32[]', space=smem, size = 0x4, offset = 0x4, fixed_abs, tag = 'smem constant byte address 0x4 - core index']
  #allocation1 [shape = 'u32[144,128]{1,0:T(1,128)}', space=vmem, size = 0x12000, scoped, tag = 'internal scratch']
  %s0 = inlined_call_operand.hbm [shape: f32[8,128], index: 0, kind: input, shape index: {}]
  %s1 = inlined_call_operand.hbm [shape: f32[128,128], index: 1, kind: input, shape index: {}]
  %s2 = inlined_call_operand.vmem [shape: f32[1,128], index: 2, kind: input, shape index: {}]
  %s3 = inlined_call_operand.hbm [shape: f32[8,128], index: 3, kind: output, shape index: {}]
  %s4 = sld [smem:[#allocation0]]
  $region34: #{tpu_custom_call.1} parent=0
    _
  %s6 = ssub.s32 1, %s4
  %s7 = scalar_select 0, %s6, %s4
  $region1: #{tpu_custom_call.1} parent=0
    #allocation2 [shape = 'u8[4096]{0}', space=vmem, size = 0x1000, scoped, tag = 'input window, operand 0, single buffered']
    #allocation3 [shape = 's32[1]{0}', space=sflag, size = 0x4, scoped, tag = 'scoped memory for tpu_custom_call.1']
    #allocation4 [shape = 's32[1]{0}', space=sflag, size = 0x4, scoped, tag = 'scoped memory for tpu_custom_call.1']
    #allocation5 [shape = 'u8[65536]{0}', space=vmem, size = 0x10000, scoped, tag = 'input window, operand 1, single buffered']
    #allocation6 [shape = 's32[1]{0}', space=sflag, size = 0x4, scoped, tag = 'scoped memory for tpu_custom_call.1']
    #allocation7 [shape = 'u8[4096]{0}', space=vmem, size = 0x1000, scoped, tag = 'output window, operand 0, single buffered']
    %8 = vsyncpa [#allocation3], 0
    %9 = vsyncpa [#allocation6], 0
    %10 = vsyncpa [#allocation4], 0
    // Predicated region
    $region2: #{tpu_custom_call.1} parent=1 // pred_check
      _
    $region3: #{tpu_custom_call.1} parent=1 // pred_check_branch
      %12 = sbr.rel (0) target = $region5
    $region4: #{tpu_custom_call.1} parent=1 // pred_region
      %s14 = ssub.s32 128, 128
      %15 = vsyncadd [#allocation3], %s14
      %s17 = sshll.u32 [#allocation2], 4
      %s18 = int_to_ptr.vmem [resolvable:$true] %s17
      %20 = dma.hbm_to_vmem [thread:$0]  %s0, 128, %s18, [#allocation3]
    $region5: #{tpu_custom_call.1} parent=1 // pred_fallthru
      _
    // Predicated region
    $region6: #{tpu_custom_call.1} parent=1 // pred_check
      _
    $region7: #{tpu_custom_call.1} parent=1 // pred_check_branch
      %22 = sbr.rel (0) target = $region9
    $region8: #{tpu_custom_call.1} parent=1 // pred_region
      %s24 = ssub.s32 2048, 2048
      %25 = vsyncadd [#allocation6], %s24
      %s26 = sshll.u32 [#allocation5], 4
      %s27 = int_to_ptr.vmem [resolvable:$true] %s26
      %32 = dma.hbm_to_vmem [thread:$0]  %s1, 2048, %s27, [#allocation6], 128, 128, 8
    $region9: #{tpu_custom_call.1} parent=1 // pred_fallthru
      _
    // Predicated region
    $region10: #{tpu_custom_call.1} parent=1 // pred_check
      _
    $region11: #{tpu_custom_call.1} parent=1 // pred_check_branch
      %34 = sbr.rel (0) target = $region13
    $region12: #{tpu_custom_call.1} parent=1 // pred_region
      _
    $region13: #{tpu_custom_call.1} parent=1 // pred_fallthru
      _
    // Predicated region
    $region14: #{tpu_custom_call.1} parent=1 // pred_check
      _
    $region15: #{tpu_custom_call.1} parent=1 // pred_check_branch
      %36 = sbr.rel (0) target = $region17
    $region16: #{tpu_custom_call.1} parent=1 // pred_region
      %37 = dma.done [#allocation3], 128
    $region17: #{tpu_custom_call.1} parent=1 // pred_fallthru
      _
    // Predicated region
    $region18: #{tpu_custom_call.1} parent=1 // pred_check
      _
    $region19: #{tpu_custom_call.1} parent=1 // pred_check_branch
      %39 = sbr.rel (0) target = $region21
    $region20: #{tpu_custom_call.1} parent=1 // pred_region
      %40 = dma.done [#allocation6], 2048
    $region21: #{tpu_custom_call.1} parent=1 // pred_fallthru
      _
    %p41 = scmp.eq.s32.totalorder 0, 0
    // Predicated region
    $region22: #{tpu_custom_call.1} parent=1 // pred_check
      %p42 = pneg %p41
    $region23: #{tpu_custom_call.1} parent=1 // pred_check_branch
      %44 = sbr.rel (%p42) target = $region25
    $region24: #{tpu_custom_call.1} parent=1 // pred_region
      %v45 = vld [vmem:[%s2] sm:$0x1]
      %v47 = vlaneseq
      %v48 = vshrl.u32 %v47, 7
      %v49 = vsub.s32 0, %v48
      %v50 = vrot.slane %v45, %v49
      %52 = vst [vmem:[#allocation7] sm:$0xff] %v50
    $region25: #{tpu_custom_call.1} parent=1 // pred_fallthru
      _
    %v53 = vld [vmem:[#allocation7] sm:$0xff]
    %v54 = vld [vmem:[#allocation2] sm:$0xff]
    %v55 = vld [vmem:[#allocation5] sm:$0xff]
    %v56 = vld [vmem:[#allocation5 + $0x8] sm:$0xff]
    %v57 = vld [vmem:[#allocation5 + $0x10] sm:$0xff]
    %v58 = vld [vmem:[#allocation5 + $0x18] sm:$0xff]
    %v59 = vld [vmem:[#allocation5 + $0x20] sm:$0xff]
    %v60 = vld [vmem:[#allocation5 + $0x28] sm:$0xff]
    %v61 = vld [vmem:[#allocation5 + $0x30] sm:$0xff]
    %v62 = vld [vmem:[#allocation5 + $0x38] sm:$0xff]
    %v63 = vld [vmem:[#allocation5 + $0x40] sm:$0xff]
    %v64 = vld [vmem:[#allocation5 + $0x48] sm:$0xff]
    %v65 = vld [vmem:[#allocation5 + $0x50] sm:$0xff]
    %v66 = vld [vmem:[#allocation5 + $0x58] sm:$0xff]
    %v67 = vld [vmem:[#allocation5 + $0x60] sm:$0xff]
    %v68 = vld [vmem:[#allocation5 + $0x68] sm:$0xff]
    %v69 = vld [vmem:[#allocation5 + $0x70] sm:$0xff]
    %v70 = vld [vmem:[#allocation5 + $0x78] sm:$0xff]
    %71 = vmatprep.subr.mxu0 0.0
    %72 = vmatpush1.msra.mxu0 %v55
    %73 = vmatprep.subr.mxu0 0.0
    %74 = vmatpush1.msra.mxu0 %v56
    %75 = vmatprep.subr.mxu0 0.0
    %76 = vmatpush1.msra.mxu0 %v57
    %77 = vmatprep.subr.mxu0 0.0
    %78 = vmatpush1.msra.mxu0 %v58
    %79 = vmatprep.subr.mxu0 0.0
    %80 = vmatpush1.msra.mxu0 %v59
    %81 = vmatprep.subr.mxu0 0.0
    %82 = vmatpush1.msra.mxu0 %v60
    %83 = vmatprep.subr.mxu0 0.0
    %84 = vmatpush1.msra.mxu0 %v61
    %85 = vmatprep.subr.mxu0 0.0
    %86 = vmatpush1.msra.mxu0 %v62
    %87 = vmatprep.subr.mxu0 0.0
    %88 = vmatpush1.msra.mxu0 %v63
    %89 = vmatprep.subr.mxu0 0.0
    %90 = vmatpush1.msra.mxu0 %v64
    %91 = vmatprep.subr.mxu0 0.0
    %92 = vmatpush1.msra.mxu0 %v65
    %93 = vmatprep.subr.mxu0 0.0
    %94 = vmatpush1.msra.mxu0 %v66
    %95 = vmatprep.subr.mxu0 0.0
    %96 = vmatpush1.msra.mxu0 %v67
    %97 = vmatprep.subr.mxu0 0.0
    %98 = vmatpush1.msra.mxu0 %v68
    %99 = vmatprep.subr.mxu0 0.0
    %100 = vmatpush1.msra.mxu0 %v69
    %101 = vmatprep.subr.mxu0 0.0
    %102 = vmatpush1.msra.mxu0 %v70
    %103 = vmatprep.subr.mxu0 0.0
    %104 = vmatpush1.msra.mxu0 0.0
    %105 = vmatprep.subr.mxu0 0.0
    %106 = vmatpush1.msra.mxu0 0.0
    %107 = vmatprep.subr.mxu0 0.0
    %108 = vmatpush1.msra.mxu0 0.0
    %109 = vmatprep.subr.mxu0 0.0
    %110 = vmatpush1.msra.mxu0 0.0
    %111 = vmatprep.subr.mxu0 0.0
    %112 = vmatpush1.msra.mxu0 0.0
    %113 = vmatprep.subr.mxu0 0.0
    %114 = vmatpush1.msra.mxu0 0.0
    %115 = vmatprep.subr.mxu0 0.0
    %116 = vmatpush1.msra.mxu0 0.0
    %117 = vmatprep.subr.mxu0 0.0
    %118 = vmatpush1.msra.mxu0 0.0
    %119 = vmatprep.subr.mxu0 0.0
    %120 = vmatpush1.msra.mxu0 0.0
    %121 = vmatprep.subr.mxu0 0.0
    %122 = vmatpush1.msra.mxu0 0.0
    %123 = vmatprep.subr.mxu0 0.0
    %124 = vmatpush1.msra.mxu0 0.0
    %125 = vmatprep.subr.mxu0 0.0
    %126 = vmatpush1.msra.mxu0 0.0
    %127 = vmatprep.subr.mxu0 0.0
    %128 = vmatpush1.msra.mxu0 0.0
    %129 = vmatprep.subr.mxu0 0.0
    %130 = vmatpush1.msra.mxu0 0.0
    %131 = vmatprep.subr.mxu0 0.0
    %132 = vmatpush1.msra.mxu0 0.0
    %133 = vmatprep.subr.mxu0 0.0
    %134 = vmatpush1.msra.mxu0 0.0
    %135 = vmatprep.mubr.f32.mxu0 0.0
    %136 = vmatmul.mubr.f32.gmra.mrb[0].mxu0 %v54
    %v137 = vpop.f32.mrb[0].mxu0
    %v138 = vadd.f32 0.0, %v137
    %v139 = vpop.f32.mrb[0].mxu0
    %140 = vdwg.mxu0
    %v141 = vadd.f32 %v53, %v138
    %142 = vst [vmem:[#allocation7] sm:$0xff] %v141
    // Predicated region
    $region26: #{tpu_custom_call.1} parent=1 // pred_check
      _
    $region27: #{tpu_custom_call.1} parent=1 // pred_check_branch
      %144 = sbr.rel (0) target = $region29
    $region28: #{tpu_custom_call.1} parent=1 // pred_region
      %s146 = ssub.s32 128, 128
      %147 = vsyncadd [#allocation4], %s146
      %s149 = sshll.u32 [#allocation7], 4
      %s150 = int_to_ptr.vmem [resolvable:$true] %s149
      %152 = dma.vmem_to_hbm [thread:$0]  %s150, 128, %s3, [#allocation4]
    $region29: #{tpu_custom_call.1} parent=1 // pred_fallthru
      _
    // Predicated region
    $region30: #{tpu_custom_call.1} parent=1 // pred_check
      _
    $region31: #{tpu_custom_call.1} parent=1 // pred_check_branch
      %154 = sbr.rel (0) target = $region33
    $region32: #{tpu_custom_call.1} parent=1 // pred_region
      %155 = dma.done [#allocation4], 128
    $region33: #{tpu_custom_call.1} parent=1 // pred_fallthru
      _
    %156 = vsyncpa [#allocation3], 1
    %157 = vsyncpa [#allocation6], 1
    %158 = vsyncpa [#allocation4], 1

</llo_original>
